<compile_context>
chip_gen: v7x
topology: tpu7x:2x2x1
jax: 0.10.0
libtpu: 0.0.40
codegen_flags: <defaults>
</compile_context>

<pallas_src>
import functools

import jax
import jax.numpy as jnp
from jax.experimental import pallas as pl
from jax.experimental.pallas import tpu as pltpu

# ----------------------------- model config ---------------------------------
IN_CHANNELS = 16
HIDDEN = 32
NUM_LAYERS = 2
NUM_HEADS = 1
ALPHA = 0.5
LN_EPS = 1e-5
N_NODES = 128
MAX_TILE_N = 4096          # nodes (lanes) per tile; tiles stay far below VMEM limits

# The seed-attention broadcast shortcut requires a single seed node; NUM_HEADS=1
# matches the reference config exactly (softmax over a size-1 dim is always 1).
assert NUM_HEADS == 1


def _round_up(a, b):
    return ((a + b - 1) // b) * b


def _cdiv(a, b):
    return (a + b - 1) // b


# ------------------- packed vector-table column layout -----------------------
# vecs: (HIDDEN, _VEC_COLS), one column per HIDDEN-length vector:
#   b_in | ln_gamma[0..L] | ln_beta[0..L] | alpha*x_new[0..L-1]
_C_B_IN = 0
_C_GAMMA = 1
_C_BETA = _C_GAMMA + (NUM_LAYERS + 1)
_C_XNEW = _C_BETA + (NUM_LAYERS + 1)
_VEC_COLS = _C_XNEW + NUM_LAYERS


# ----------------------------- shared math -----------------------------------
def _ln_last(v, gamma, beta):
    """Reference / seed-chain LN over the last axis (two-pass, node-major)."""
    mu = jnp.mean(v, axis=-1, keepdims=True)
    var = jnp.mean((v - mu) ** 2, axis=-1, keepdims=True)
    return (v - mu) * jax.lax.rsqrt(var + LN_EPS) * gamma + beta


def _ln_feat(v, gamma, beta):
    """Kernel LN over the feature (sublane) axis, single pass.

    v: (HIDDEN, TILE_N); gamma/beta: (HIDDEN, 1) columns broadcast along lanes.
    """
    mu = jnp.mean(v, axis=0, keepdims=True)            # (1, T)
    ms = jnp.mean(v * v, axis=0, keepdims=True)        # (1, T)
    var = ms - mu * mu
    return (v - mu) * jax.lax.rsqrt(var + LN_EPS) * gamma + beta


# ----------------------------- Pallas kernel --------------------------------
def seedtrans_kernel(x_ref, w_ref, vec_ref, o_ref, *, num_layers, alpha):
    # x_ref:   (IN_CHANNELS, TILE_N)  node features, feature-major tile
    # w_ref:   (HIDDEN, IN_CHANNELS)  W_in^T (pre-transposed at init)
    # vec_ref: (HIDDEN, _VEC_COLS)    b_in | gamma | beta | alpha*x_new columns
    # o_ref:   (HIDDEN, TILE_N)
    one_m_alpha = 1.0 - alpha

    b_in = vec_ref[:, _C_B_IN:_C_B_IN + 1]              # (H, 1)
    g0 = vec_ref[:, _C_GAMMA:_C_GAMMA + 1]
    be0 = vec_ref[:, _C_BETA:_C_BETA + 1]

    # ---- input projection + LN0 + relu (the only MXU work per tile) ----
    h = jnp.dot(w_ref[...], x_ref[...],
                preferred_element_type=jnp.float32) + b_in      # (H, T)
    h = jnp.maximum(_ln_feat(h, g0, be0), 0.0)

    # ---- seed-attention layers: per-node update is a broadcast of the
    #      precomputed (grid-invariant) alpha * x_new column ----
    for i in range(num_layers):
        gi = vec_ref[:, _C_GAMMA + i + 1:_C_GAMMA + i + 2]
        bi = vec_ref[:, _C_BETA + i + 1:_C_BETA + i + 2]
        xnew = vec_ref[:, _C_XNEW + i:_C_XNEW + i + 1]   # (H, 1), already * alpha
        h = jnp.maximum(_ln_feat(xnew + one_m_alpha * h, gi, bi), 0.0)

    o_ref[...] = h


# ------------------- one-time parameter packing (outside jit) ----------------
def pack_params(params):
    """Pack grid-invariant tables once at init; keeps originals for the seed chain."""
    vecs_static = jnp.concatenate(
        [params["b_in"][:, None],          # (H, 1)
         params["ln_gamma"].T,             # (H, L+1)
         params["ln_beta"].T],             # (H, L+1)
        axis=1).astype(jnp.float32)        # (H, _C_XNEW)
    packed = dict(params)
    packed["w_in_t"] = params["w_in"].T.astype(jnp.float32)   # (H, C_in)
    packed["vecs_static"] = vecs_static
    return packed


# ----------------------------- wrapper (single jit) --------------------------
def _seedtrans_forward(x, seed_node_id, packed):
    """x: [N, IN_CHANNELS] float32. Returns [N, HIDDEN] float32."""
    n, c_in = x.shape

    # ---- grid-invariant seed chain (tiny serial matvecs, plain JAX, same jit).
    # softmax over the size-1 key dim == 1 => x_new_i = out_proj_i(V_i(h_seed_i))
    # for EVERY node; only the seed node's hidden state is needed to build it.
    hs = x[seed_node_id] @ packed["w_in"] + packed["b_in"]                # (H,)
    hs = jnp.maximum(_ln_last(hs, packed["ln_gamma"][0],
                              packed["ln_beta"][0]), 0.0)
    xnew_cols = []
    for i in range(NUM_LAYERS):
        v = hs @ packed["w_v"][i] + packed["b_v"][i]
        out_i = v @ packed["w_o"][i] + packed["b_o"][i]
        xnew_cols.append(ALPHA * out_i)                                   # pre-scaled
        if i + 1 < NUM_LAYERS:                 # seed state only needed for next layer
            hs = ALPHA * out_i + (1.0 - ALPHA) * hs
            hs = jnp.maximum(_ln_last(hs, packed["ln_gamma"][i + 1],
                                      packed["ln_beta"][i + 1]), 0.0)
    xnew = jnp.stack(xnew_cols, axis=1)                                   # (H, L)
    vecs = jnp.concatenate([packed["vecs_static"], xnew], axis=1)         # (H, _VEC_COLS)

    # ---- feature-major layout plumbing + balanced lane tiling ----
    x_t = x.astype(jnp.float32).T                                         # (C_in, N)
    n128 = _round_up(n, 128)
    num_tiles = _cdiv(n128, MAX_TILE_N)
    if num_tiles > 1 and num_tiles % 2 == 1:
        num_tiles += 1          # even step count -> both v7x TensorCores busy
    tile_n = _round_up(_cdiv(n128, num_tiles), 128)
    n_pad = tile_n * num_tiles
    if n_pad != n:
        x_t = jnp.pad(x_t, ((0, 0), (0, n_pad - n)))

    kernel = functools.partial(seedtrans_kernel,
                               num_layers=NUM_LAYERS, alpha=ALPHA)
    out_t = pl.pallas_call(
        kernel,
        out_shape=jax.ShapeDtypeStruct((HIDDEN, n_pad), jnp.float32),
        grid_spec=pltpu.PrefetchScalarGridSpec(
            num_scalar_prefetch=0,
            grid=(num_tiles,),
            in_specs=[
                pl.BlockSpec((c_in, tile_n), lambda i: (0, i)),
                pl.BlockSpec((HIDDEN, c_in), lambda i: (0, 0)),
                pl.BlockSpec((HIDDEN, _VEC_COLS), lambda i: (0, 0)),
            ],
            out_specs=pl.BlockSpec((HIDDEN, tile_n), lambda i: (0, i)),
        ),
        compiler_params=pltpu.CompilerParams(
            dimension_semantics=("parallel",)),
    )(x_t, packed["w_in_t"], vecs)

    return out_t[:, :n].T                                                 # (N, H)


seedtrans_forward_pallas = jax.jit(_seedtrans_forward)


# ----------------------------- pure-JAX reference ----------------------------
def seedtrans_forward_ref(x, seed_node_id, params):
    """Faithful per-node reference mirroring the PyTorch forward (eval mode)."""
    scale = (HIDDEN // NUM_HEADS) ** -0.5
    h = x @ params["w_in"] + params["b_in"][None, :]
    h = _ln_last(h, params["ln_gamma"][0][None, :], params["ln_beta"][0][None, :])
    h = jnp.maximum(h, 0.0)
    for i in range(NUM_LAYERS):
        seed_feat = h[seed_node_id][None, :]
        q = h @ params["w_q"][i] + params["b_q"][i][None, :]          # [N, H]
        k = seed_feat @ params["w_k"][i] + params["b_k"][i][None, :]  # [1, H]
        v = seed_feat @ params["w_v"][i] + params["b_v"][i][None, :]  # [1, H]
        scores = (q @ k.T) * scale                                    # [N, 1]
        weights = jax.nn.softmax(scores[:, :, None], axis=2)          # softmax over size-1 dim
        attn_out = weights[:, 0, :] * v                               # [N, H] (broadcast)
        x_new = attn_out @ params["w_o"][i] + params["b_o"][i][None, :]
        h = ALPHA * x_new + (1.0 - ALPHA) * h
        h = _ln_last(h, params["ln_gamma"][i + 1][None, :],
                     params["ln_beta"][i + 1][None, :])
        h = jnp.maximum(h, 0.0)
    return h


# ----------------------------- parameter init --------------------------------
def init_params(key):
    ks = jax.random.split(key, 16)

    def lin(k, fan_in, fan_out):
        bound = 1.0 / (fan_in ** 0.5)
        kw, kb = jax.random.split(k)
        w = jax.random.uniform(kw, (fan_in, fan_out), jnp.float32, -bound, bound)
        b = jax.random.uniform(kb, (fan_out,), jnp.float32, -bound, bound)
        return w, b

    w_in, b_in = lin(ks[0], IN_CHANNELS, HIDDEN)
    w_q, b_q, w_k, b_k, w_v, b_v, w_o, b_o = [], [], [], [], [], [], [], []
    for i in range(NUM_LAYERS):
        base = 1 + 4 * i
        wq, bq = lin(ks[base + 0], HIDDEN, HIDDEN)
        wk, bk = lin(ks[base + 1], HIDDEN, HIDDEN)
        wv, bv = lin(ks[base + 2], HIDDEN, HIDDEN)
        wo, bo = lin(ks[base + 3], HIDDEN, HIDDEN)
        w_q.append(wq); b_q.append(bq)
        w_k.append(wk); b_k.append(bk)
        w_v.append(wv); b_v.append(bv)
        w_o.append(wo); b_o.append(bo)

    return {
        "w_in": w_in, "b_in": b_in,
        "w_q": jnp.stack(w_q), "b_q": jnp.stack(b_q),
        "w_k": jnp.stack(w_k), "b_k": jnp.stack(b_k),
        "w_v": jnp.stack(w_v), "b_v": jnp.stack(b_v),
        "w_o": jnp.stack(w_o), "b_o": jnp.stack(b_o),
        "ln_gamma": jnp.ones((NUM_LAYERS + 1, HIDDEN), jnp.float32),
        "ln_beta": jnp.zeros((NUM_LAYERS + 1, HIDDEN), jnp.float32),
    }


# --------------------------------- main --------------------------------------
if __name__ == "__main__":
    key = jax.random.PRNGKey(0)
    k_x, k_p = jax.random.split(key)
    x = jax.random.normal(k_x, (N_NODES, IN_CHANNELS), jnp.float32)
    params = init_params(k_p)
    packed = pack_params(params)          # one-time table packing
    seed_node_id = 3

    out = seedtrans_forward_pallas(x, seed_node_id, packed)
    out = jax.block_until_ready(out)

    ref = seedtrans_forward_ref(x, seed_node_id, params)
    assert out.shape == (N_NODES, HIDDEN) and out.dtype == jnp.float32
    err = float(jnp.max(jnp.abs(out - ref)))
    assert jnp.allclose(out, ref, atol=1e-4, rtol=1e-4), f"max abs err {err}"

    print("KERNEL_OK")
</pallas_src>

<mosaic_0001>
module attributes {stable_mosaic.version = 11 : i64} {
  func.func @seedtrans_kernel(%arg0: i32, %arg1: memref<16x128xf32, #tpu.memory_space<vmem>>, %arg2: memref<32x16xf32, #tpu.memory_space<vmem>>, %arg3: memref<32x9xf32, #tpu.memory_space<vmem>>, %arg4: memref<32x128xf32, #tpu.memory_space<vmem>>) attributes {dimension_semantics = [#tpu.dimension_semantics<parallel>], iteration_bounds = array<i64: 1>, scalar_prefetch = 0 : i64, scratch_operands = 0 : i64, tpu.core_type = #tpu.core_type<tc>, window_params = [{transform_indices = @transform_0, window_bounds = array<i64: 16, 128>}, {pipeline_mode = #tpu.pipeline_mode<synchronous>, transform_indices = @transform_1, window_bounds = array<i64: 32, 16>}, {pipeline_mode = #tpu.pipeline_mode<synchronous>, transform_indices = @transform_2, window_bounds = array<i64: 32, 9>}, {transform_indices = @transform_3, window_bounds = array<i64: 32, 128>}]} {
    %c0 = arith.constant 0 : index
    %c0_0 = arith.constant 0 : index
    %0 = vector.load %arg3[%c0, %c0_0] : memref<32x9xf32, #tpu.memory_space<vmem>>, vector<32x1xf32>
    %c0_1 = arith.constant 0 : index
    %c1 = arith.constant 1 : index
    %1 = vector.load %arg3[%c0_1, %c1] : memref<32x9xf32, #tpu.memory_space<vmem>>, vector<32x1xf32>
    %c0_2 = arith.constant 0 : index
    %c4 = arith.constant 4 : index
    %2 = vector.load %arg3[%c0_2, %c4] : memref<32x9xf32, #tpu.memory_space<vmem>>, vector<32x1xf32>
    %c0_3 = arith.constant 0 : index
    %c0_4 = arith.constant 0 : index
    %3 = vector.load %arg2[%c0_3, %c0_4] : memref<32x16xf32, #tpu.memory_space<vmem>>, vector<32x16xf32>
    %c0_5 = arith.constant 0 : index
    %c0_6 = arith.constant 0 : index
    %4 = vector.load %arg1[%c0_5, %c0_6] : memref<16x128xf32, #tpu.memory_space<vmem>>, vector<16x128xf32>
    %cst = arith.constant dense<0.000000e+00> : vector<32x128xf32>
    %5 = tpu.matmul %3, %4, %cst {dimension_numbers = #tpu.dot_dimension_numbers<[1], [0], [0], [1], [0, 0, 1, 1], [], []>} : vector<32x16xf32>, vector<16x128xf32>, vector<32x128xf32> -> vector<32x128xf32>
    %6 = vector.broadcast %0 : vector<32x1xf32> to vector<32x128xf32>
    %7 = arith.addf %5, %6 : vector<32x128xf32>
    %cst_7 = arith.constant dense<0.000000e+00> : vector<128xf32>
    %8 = vector.multi_reduction <add>, %7, %cst_7 [0] : vector<32x128xf32> to vector<128xf32>
    %9 = vector.shape_cast %8 : vector<128xf32> to vector<1x128xf32>
    %cst_8 = arith.constant 3.200000e+01 : f32
    %10 = vector.broadcast %cst_8 : f32 to vector<1x128xf32>
    %11 = arith.divf %9, %10 : vector<1x128xf32>
    %12 = arith.mulf %7, %7 : vector<32x128xf32>
    %cst_9 = arith.constant dense<0.000000e+00> : vector<128xf32>
    %13 = vector.multi_reduction <add>, %12, %cst_9 [0] : vector<32x128xf32> to vector<128xf32>
    %14 = vector.shape_cast %13 : vector<128xf32> to vector<1x128xf32>
    %cst_10 = arith.constant 3.200000e+01 : f32
    %15 = vector.broadcast %cst_10 : f32 to vector<1x128xf32>
    %16 = arith.divf %14, %15 : vector<1x128xf32>
    %17 = arith.mulf %11, %11 : vector<1x128xf32>
    %18 = arith.subf %16, %17 : vector<1x128xf32>
    %19 = vector.broadcast %11 : vector<1x128xf32> to vector<32x128xf32>
    %20 = arith.subf %7, %19 : vector<32x128xf32>
    %cst_11 = arith.constant 9.99999974E-6 : f32
    %21 = vector.broadcast %cst_11 : f32 to vector<1x128xf32>
    %22 = arith.addf %18, %21 : vector<1x128xf32>
    %23 = math.rsqrt %22 : vector<1x128xf32>
    %24 = vector.broadcast %23 : vector<1x128xf32> to vector<32x128xf32>
    %25 = arith.mulf %20, %24 : vector<32x128xf32>
    %26 = vector.broadcast %1 : vector<32x1xf32> to vector<32x128xf32>
    %27 = arith.mulf %25, %26 : vector<32x128xf32>
    %28 = vector.broadcast %2 : vector<32x1xf32> to vector<32x128xf32>
    %29 = arith.addf %27, %28 : vector<32x128xf32>
    %cst_12 = arith.constant 0.000000e+00 : f32
    %30 = vector.broadcast %cst_12 : f32 to vector<32x128xf32>
    %31 = arith.maximumf %29, %30 : vector<32x128xf32>
    %c0_13 = arith.constant 0 : index
    %c2 = arith.constant 2 : index
    %32 = vector.load %arg3[%c0_13, %c2] : memref<32x9xf32, #tpu.memory_space<vmem>>, vector<32x1xf32>
    %c0_14 = arith.constant 0 : index
    %c5 = arith.constant 5 : index
    %33 = vector.load %arg3[%c0_14, %c5] : memref<32x9xf32, #tpu.memory_space<vmem>>, vector<32x1xf32>
    %c0_15 = arith.constant 0 : index
    %c7 = arith.constant 7 : index
    %34 = vector.load %arg3[%c0_15, %c7] : memref<32x9xf32, #tpu.memory_space<vmem>>, vector<32x1xf32>
    %cst_16 = arith.constant 5.000000e-01 : f32
    %35 = vector.broadcast %cst_16 : f32 to vector<32x128xf32>
    %36 = arith.mulf %35, %31 : vector<32x128xf32>
    %37 = vector.broadcast %34 : vector<32x1xf32> to vector<32x128xf32>
    %38 = arith.addf %37, %36 : vector<32x128xf32>
    %cst_17 = arith.constant dense<0.000000e+00> : vector<128xf32>
    %39 = vector.multi_reduction <add>, %38, %cst_17 [0] : vector<32x128xf32> to vector<128xf32>
    %40 = vector.shape_cast %39 : vector<128xf32> to vector<1x128xf32>
    %cst_18 = arith.constant 3.200000e+01 : f32
    %41 = vector.broadcast %cst_18 : f32 to vector<1x128xf32>
    %42 = arith.divf %40, %41 : vector<1x128xf32>
    %43 = arith.mulf %38, %38 : vector<32x128xf32>
    %cst_19 = arith.constant dense<0.000000e+00> : vector<128xf32>
    %44 = vector.multi_reduction <add>, %43, %cst_19 [0] : vector<32x128xf32> to vector<128xf32>
    %45 = vector.shape_cast %44 : vector<128xf32> to vector<1x128xf32>
    %cst_20 = arith.constant 3.200000e+01 : f32
    %46 = vector.broadcast %cst_20 : f32 to vector<1x128xf32>
    %47 = arith.divf %45, %46 : vector<1x128xf32>
    %48 = arith.mulf %42, %42 : vector<1x128xf32>
    %49 = arith.subf %47, %48 : vector<1x128xf32>
    %50 = vector.broadcast %42 : vector<1x128xf32> to vector<32x128xf32>
    %51 = arith.subf %38, %50 : vector<32x128xf32>
    %cst_21 = arith.constant 9.99999974E-6 : f32
    %52 = vector.broadcast %cst_21 : f32 to vector<1x128xf32>
    %53 = arith.addf %49, %52 : vector<1x128xf32>
    %54 = math.rsqrt %53 : vector<1x128xf32>
    %55 = vector.broadcast %54 : vector<1x128xf32> to vector<32x128xf32>
    %56 = arith.mulf %51, %55 : vector<32x128xf32>
    %57 = vector.broadcast %32 : vector<32x1xf32> to vector<32x128xf32>
    %58 = arith.mulf %56, %57 : vector<32x128xf32>
    %59 = vector.broadcast %33 : vector<32x1xf32> to vector<32x128xf32>
    %60 = arith.addf %58, %59 : vector<32x128xf32>
    %cst_22 = arith.constant 0.000000e+00 : f32
    %61 = vector.broadcast %cst_22 : f32 to vector<32x128xf32>
    %62 = arith.maximumf %60, %61 : vector<32x128xf32>
    %c0_23 = arith.constant 0 : index
    %c3 = arith.constant 3 : index
    %63 = vector.load %arg3[%c0_23, %c3] : memref<32x9xf32, #tpu.memory_space<vmem>>, vector<32x1xf32>
    %c0_24 = arith.constant 0 : index
    %c6 = arith.constant 6 : index
    %64 = vector.load %arg3[%c0_24, %c6] : memref<32x9xf32, #tpu.memory_space<vmem>>, vector<32x1xf32>
    %c0_25 = arith.constant 0 : index
    %c8 = arith.constant 8 : index
    %65 = vector.load %arg3[%c0_25, %c8] : memref<32x9xf32, #tpu.memory_space<vmem>>, vector<32x1xf32>
    %cst_26 = arith.constant 5.000000e-01 : f32
    %66 = vector.broadcast %cst_26 : f32 to vector<32x128xf32>
    %67 = arith.mulf %66, %62 : vector<32x128xf32>
    %68 = vector.broadcast %65 : vector<32x1xf32> to vector<32x128xf32>
    %69 = arith.addf %68, %67 : vector<32x128xf32>
    %cst_27 = arith.constant dense<0.000000e+00> : vector<128xf32>
    %70 = vector.multi_reduction <add>, %69, %cst_27 [0] : vector<32x128xf32> to vector<128xf32>
    %71 = vector.shape_cast %70 : vector<128xf32> to vector<1x128xf32>
    %cst_28 = arith.constant 3.200000e+01 : f32
    %72 = vector.broadcast %cst_28 : f32 to vector<1x128xf32>
    %73 = arith.divf %71, %72 : vector<1x128xf32>
    %74 = arith.mulf %69, %69 : vector<32x128xf32>
    %cst_29 = arith.constant dense<0.000000e+00> : vector<128xf32>
    %75 = vector.multi_reduction <add>, %74, %cst_29 [0] : vector<32x128xf32> to vector<128xf32>
    %76 = vector.shape_cast %75 : vector<128xf32> to vector<1x128xf32>
    %cst_30 = arith.constant 3.200000e+01 : f32
    %77 = vector.broadcast %cst_30 : f32 to vector<1x128xf32>
    %78 = arith.divf %76, %77 : vector<1x128xf32>
    %79 = arith.mulf %73, %73 : vector<1x128xf32>
    %80 = arith.subf %78, %79 : vector<1x128xf32>
    %81 = vector.broadcast %73 : vector<1x128xf32> to vector<32x128xf32>
    %82 = arith.subf %69, %81 : vector<32x128xf32>
    %cst_31 = arith.constant 9.99999974E-6 : f32
    %83 = vector.broadcast %cst_31 : f32 to vector<1x128xf32>
    %84 = arith.addf %80, %83 : vector<1x128xf32>
    %85 = math.rsqrt %84 : vector<1x128xf32>
    %86 = vector.broadcast %85 : vector<1x128xf32> to vector<32x128xf32>
    %87 = arith.mulf %82, %86 : vector<32x128xf32>
    %88 = vector.broadcast %63 : vector<32x1xf32> to vector<32x128xf32>
    %89 = arith.mulf %87, %88 : vector<32x128xf32>
    %90 = vector.broadcast %64 : vector<32x1xf32> to vector<32x128xf32>
    %91 = arith.addf %89, %90 : vector<32x128xf32>
    %cst_32 = arith.constant 0.000000e+00 : f32
    %92 = vector.broadcast %cst_32 : f32 to vector<32x128xf32>
    %93 = arith.maximumf %91, %92 : vector<32x128xf32>
    %c0_33 = arith.constant 0 : index
    %c0_34 = arith.constant 0 : index
    %94 = vector.load %arg4[%c0_33, %c0_34] : memref<32x128xf32, #tpu.memory_space<vmem>>, vector<32x128xf32>
    tpu.vector_store %arg4[%c0_33, %c0_34], %93 {strides = array<i32>} : memref<32x128xf32, #tpu.memory_space<vmem>>, vector<32x128xf32>,
    return
  }
  func.func @transform_0(%arg0: i32) -> (i32, i32) {
    %c0_i32 = arith.constant 0 : i32
    %c0_i32_0 = arith.constant 0 : i32
    return %c0_i32, %arg0 : i32, i32
  }
  func.func @transform_1(%arg0: i32) -> (i32, i32) {
    %c0_i32 = arith.constant 0 : i32
    %c0_i32_0 = arith.constant 0 : i32
    %c0_i32_1 = arith.constant 0 : i32
    return %c0_i32, %c0_i32_0 : i32, i32
  }
  func.func @transform_2(%arg0: i32) -> (i32, i32) {
    %c0_i32 = arith.constant 0 : i32
    %c0_i32_0 = arith.constant 0 : i32
    %c0_i32_1 = arith.constant 0 : i32
    return %c0_i32, %c0_i32_0 : i32, i32
  }
  func.func @transform_3(%arg0: i32) -> (i32, i32) {
    %c0_i32 = arith.constant 0 : i32
    %c0_i32_0 = arith.constant 0 : i32
    return %c0_i32, %arg0 : i32, i32
  }
}

</mosaic_0001>

<llo_original>
// kernel: _seedtrans_forward.1
$region0: #{_seedtrans_forward.1}
  #allocation0 [shape = 'u32[]', space=smem, size = 0x4, offset = 0x4, fixed_abs, tag = 'smem constant byte address 0x4 - core index']
  #allocation1 [shape = 'u32[144,128]{1,0:T(1,128)}', space=vmem, size = 0x12000, scoped, tag = 'internal scratch']
  %s0 = inlined_call_operand.vmem [shape: f32[16,128], index: 0, kind: input, shape index: {}]
  %s1 = inlined_call_operand.vmem [shape: f32[32,16], index: 1, kind: input, shape index: {}]
  %s2 = inlined_call_operand.vmem [shape: f32[32,9], index: 2, kind: input, shape index: {}]
  %s3 = inlined_call_operand.hbm [shape: f32[32,128], index: 3, kind: output, shape index: {}]
  %s4 = sld [smem:[#allocation0]]
  $region22: #{_seedtrans_forward.1} parent=0
    _
  %s6 = ssub.s32 1, %s4
  %s7 = scalar_select 0, %s6, %s4
  $region1: #{_seedtrans_forward.1} parent=0
    #allocation2 [shape = 'u8[16384]{0}', space=vmem, size = 0x4000, scoped, tag = 'output window, operand 0, single buffered']
    #allocation3 [shape = 's32[1]{0}', space=sflag, size = 0x4, scoped, tag = 'scoped memory for _seedtrans_forward.1']
    %8 = vsyncpa [#allocation3], 0
    // Predicated region
    $region2: #{_seedtrans_forward.1} parent=1 // pred_check
      _
    $region3: #{_seedtrans_forward.1} parent=1 // pred_check_branch
      %10 = sbr.rel (0) target = $region5
    $region4: #{_seedtrans_forward.1} parent=1 // pred_region
      _
    $region5: #{_seedtrans_forward.1} parent=1 // pred_fallthru
      _
    // Predicated region
    $region6: #{_seedtrans_forward.1} parent=1 // pred_check
      _
    $region7: #{_seedtrans_forward.1} parent=1 // pred_check_branch
      %12 = sbr.rel (0) target = $region9
    $region8: #{_seedtrans_forward.1} parent=1 // pred_region
      _
    $region9: #{_seedtrans_forward.1} parent=1 // pred_fallthru
      _
    // Predicated region
    $region10: #{_seedtrans_forward.1} parent=1 // pred_check
      _
    $region11: #{_seedtrans_forward.1} parent=1 // pred_check_branch
      %14 = sbr.rel (0) target = $region13
    $region12: #{_seedtrans_forward.1} parent=1 // pred_region
      _
    $region13: #{_seedtrans_forward.1} parent=1 // pred_fallthru
      _
    %v15 = vld [vmem:[%s2] sm:$0xff]
    %v16 = vld [vmem:[%s2 + $0x8] sm:$0xff]
    %v17 = vld [vmem:[%s2 + $0x10] sm:$0xff]
    %v18 = vld [vmem:[%s2 + $0x18] sm:$0xff]
    %v19 = vld [vmem:[%s1] sm:$0xff]
    %v20 = vld [vmem:[%s1 + $0x8] sm:$0xff]
    %v21 = vld [vmem:[%s1 + $0x10] sm:$0xff]
    %v22 = vld [vmem:[%s1 + $0x18] sm:$0xff]
    %v23 = vld [vmem:[%s0] sm:$0xff]
    %v24 = vld [vmem:[%s0 + $0x8] sm:$0xff]
    %26 = vset.pattern.permute.xlu0 0
    %27 = vperm.xlu0 %26, %v15
    %v28 = vpop.permute.xlu0 %27
    %31 = vset.pattern.permute.xlu0 0
    %32 = vperm.xlu0 %31, %v16
    %v33 = vpop.permute.xlu0 %32
    %36 = vset.pattern.permute.xlu0 0
    %37 = vperm.xlu0 %36, %v17
    %v38 = vpop.permute.xlu0 %37
    %41 = vset.pattern.permute.xlu0 0
    %42 = vperm.xlu0 %41, %v18
    %v43 = vpop.permute.xlu0 %42
    %vm45 = vcmask 130048
    %v47 = vsel %vm45, %v19, 0
    %v50 = vsel %vm45, %v20, 0
    %v53 = vsel %vm45, %v21, 0
    %v56 = vsel %vm45, %v22, 0
    %58 = vmatprep.subr.mxu0 0.0
    %59 = vmatpush1.msra.mxu0 %v23
    %60 = vmatprep.subr.mxu0 0.0
    %61 = vmatpush1.msra.mxu0 %v24
    %62 = vmatprep.subr.mxu0 0.0
    %63 = vmatpush1.msra.mxu0 0.0
    %64 = vmatprep.subr.mxu0 0.0
    %65 = vmatpush1.msra.mxu0 0.0
    %66 = vmatprep.subr.mxu0 0.0
    %67 = vmatpush1.msra.mxu0 0.0
    %68 = vmatprep.subr.mxu0 0.0
    %69 = vmatpush1.msra.mxu0 0.0
    %70 = vmatprep.subr.mxu0 0.0
    %71 = vmatpush1.msra.mxu0 0.0
    %72 = vmatprep.subr.mxu0 0.0
    %73 = vmatpush1.msra.mxu0 0.0
    %74 = vmatprep.subr.mxu0 0.0
    %75 = vmatpush1.msra.mxu0 0.0
    %76 = vmatprep.subr.mxu0 0.0
    %77 = vmatpush1.msra.mxu0 0.0
    %78 = vmatprep.subr.mxu0 0.0
    %79 = vmatpush1.msra.mxu0 0.0
    %80 = vmatprep.subr.mxu0 0.0
    %81 = vmatpush1.msra.mxu0 0.0
    %82 = vmatprep.subr.mxu0 0.0
    %83 = vmatpush1.msra.mxu0 0.0
    %84 = vmatprep.subr.mxu0 0.0
    %85 = vmatpush1.msra.mxu0 0.0
    %86 = vmatprep.subr.mxu0 0.0
    %87 = vmatpush1.msra.mxu0 0.0
    %88 = vmatprep.subr.mxu0 0.0
    %89 = vmatpush1.msra.mxu0 0.0
    %90 = vmatprep.subr.mxu0 0.0
    %91 = vmatpush1.msra.mxu0 0.0
    %92 = vmatprep.subr.mxu0 0.0
    %93 = vmatpush1.msra.mxu0 0.0
    %94 = vmatprep.subr.mxu0 0.0
    %95 = vmatpush1.msra.mxu0 0.0
    %96 = vmatprep.subr.mxu0 0.0
    %97 = vmatpush1.msra.mxu0 0.0
    %98 = vmatprep.subr.mxu0 0.0
    %99 = vmatpush1.msra.mxu0 0.0
    %100 = vmatprep.subr.mxu0 0.0
    %101 = vmatpush1.msra.mxu0 0.0
    %102 = vmatprep.subr.mxu0 0.0
    %103 = vmatpush1.msra.mxu0 0.0
    %104 = vmatprep.subr.mxu0 0.0
    %105 = vmatpush1.msra.mxu0 0.0
    %106 = vmatprep.subr.mxu0 0.0
    %107 = vmatpush1.msra.mxu0 0.0
    %108 = vmatprep.subr.mxu0 0.0
    %109 = vmatpush1.msra.mxu0 0.0
    %110 = vmatprep.subr.mxu0 0.0
    %111 = vmatpush1.msra.mxu0 0.0
    %112 = vmatprep.subr.mxu0 0.0
    %113 = vmatpush1.msra.mxu0 0.0
    %114 = vmatprep.subr.mxu0 0.0
    %115 = vmatpush1.msra.mxu0 0.0
    %116 = vmatprep.subr.mxu0 0.0
    %117 = vmatpush1.msra.mxu0 0.0
    %118 = vmatprep.subr.mxu0 0.0
    %119 = vmatpush1.msra.mxu0 0.0
    %120 = vmatprep.subr.mxu0 0.0
    %121 = vmatpush1.msra.mxu0 0.0
    %122 = vmatprep.mubr.f32.mxu0 0.0
    %123 = vmatmul.mubr.f32.gmra.mrb[0].mxu0 %v47
    %v124 = vpop.f32.mrb[0].mxu0
    %v125 = vadd.f32 %v28, %v124
    %v126 = vpop.f32.mrb[0].mxu0
    %127 = vmatprep.mubr.f32.mxu0 0.0
    %128 = vmatmul.mubr.f32.gmra.mrb[0].mxu0 %v50
    %v129 = vpop.f32.mrb[0].mxu0
    %v130 = vadd.f32 %v33, %v129
    %v131 = vpop.f32.mrb[0].mxu0
    %132 = vmatprep.mubr.f32.mxu0 0.0
    %133 = vmatmul.mubr.f32.gmra.mrb[0].mxu0 %v53
    %v134 = vpop.f32.mrb[0].mxu0
    %v135 = vadd.f32 %v38, %v134
    %v136 = vpop.f32.mrb[0].mxu0
    %137 = vmatprep.mubr.f32.mxu0 0.0
    %138 = vmatmul.mubr.f32.gmra.mrb[0].mxu0 %v56
    %v139 = vpop.f32.mrb[0].mxu0
    %v140 = vadd.f32 %v43, %v139
    %v141 = vpop.f32.mrb[0].mxu0
    %142 = vdwg.mxu0
    %v143 = vadd.f32 %v125, %v130
    %v144 = vadd.f32 %v143, %v135
    %v145 = vadd.f32 %v144, %v140
    %v146 = vrot.slane %v145, 4
    %v147 = vadd.f32 %v145, %v146
    %v148 = vrot.slane %v147, 2
    %v149 = vadd.f32 %v147, %v148
    %v150 = vrot.slane %v149, 1
    %v151 = vadd.f32 %v149, %v150
    %v152 = vrcp.pop 32.0
    %v153 = vmul.f32 %v151, %v152
    %v154 = vmul.f32 %v125, %v125
    %v155 = vmul.f32 %v130, %v130
    %v156 = vmul.f32 %v135, %v135
    %v157 = vmul.f32 %v140, %v140
    %v158 = vadd.f32 %v154, %v155
    %v159 = vadd.f32 %v158, %v156
    %v160 = vadd.f32 %v159, %v157
    %v161 = vrot.slane %v160, 4
    %v162 = vadd.f32 %v160, %v161
    %v163 = vrot.slane %v162, 2
    %v164 = vadd.f32 %v162, %v163
    %v165 = vrot.slane %v164, 1
    %v166 = vadd.f32 %v164, %v165
    %v167 = vmul.f32 %v166, %v152
    %v168 = vmul.f32 %v153, %v153
    %v169 = vsub.f32 %v167, %v168
    %v170 = vsub.f32 %v125, %v153
    %v171 = vsub.f32 %v130, %v153
    %v172 = vsub.f32 %v135, %v153
    %v173 = vsub.f32 %v140, %v153
    %v174 = vadd.f32 %v169, 1e-05
    %v175 = vrsqrt.pop %v174
    %v176 = vmul.f32 %v170, %v175
    %v177 = vmul.f32 %v171, %v175
    %v178 = vmul.f32 %v172, %v175
    %v179 = vmul.f32 %v173, %v175
    %180 = vset.pattern.permute.xlu0 1
    %181 = vperm.xlu0 %180, %v15
    %v182 = vpop.permute.xlu0 %181
    %184 = vset.pattern.permute.xlu0 1
    %185 = vperm.xlu0 %184, %v16
    %v186 = vpop.permute.xlu0 %185
    %188 = vset.pattern.permute.xlu0 1
    %189 = vperm.xlu0 %188, %v17
    %v190 = vpop.permute.xlu0 %189
    %192 = vset.pattern.permute.xlu0 1
    %193 = vperm.xlu0 %192, %v18
    %v194 = vpop.permute.xlu0 %193
    %v196 = vmul.f32 %v176, %v182
    %v197 = vmul.f32 %v177, %v186
    %v198 = vmul.f32 %v178, %v190
    %v199 = vmul.f32 %v179, %v194
    %200 = vset.pattern.permute.xlu0 4
    %201 = vperm.xlu0 %200, %v15
    %v202 = vpop.permute.xlu0 %201
    %204 = vset.pattern.permute.xlu0 4
    %205 = vperm.xlu0 %204, %v16
    %v206 = vpop.permute.xlu0 %205
    %208 = vset.pattern.permute.xlu0 4
    %209 = vperm.xlu0 %208, %v17
    %v210 = vpop.permute.xlu0 %209
    %212 = vset.pattern.permute.xlu0 4
    %213 = vperm.xlu0 %212, %v18
    %v214 = vpop.permute.xlu0 %213
    %v216 = vadd.f32 %v196, %v202
    %v217 = vadd.f32 %v197, %v206
    %v218 = vadd.f32 %v198, %v210
    %v219 = vadd.f32 %v199, %v214
    %v220 = vmax.f32 %v216, 0.0
    %v221 = vmax.f32 %v217, 0.0
    %v222 = vmax.f32 %v218, 0.0
    %v223 = vmax.f32 %v219, 0.0
    %v224 = vmul.f32 %v220, 0.5
    %v225 = vmul.f32 %v221, 0.5
    %v226 = vmul.f32 %v222, 0.5
    %v227 = vmul.f32 %v223, 0.5
    %228 = vset.pattern.permute.xlu0 7
    %229 = vperm.xlu0 %228, %v15
    %v230 = vpop.permute.xlu0 %229
    %232 = vset.pattern.permute.xlu0 7
    %233 = vperm.xlu0 %232, %v16
    %v234 = vpop.permute.xlu0 %233
    %236 = vset.pattern.permute.xlu0 7
    %237 = vperm.xlu0 %236, %v17
    %v238 = vpop.permute.xlu0 %237
    %240 = vset.pattern.permute.xlu0 7
    %241 = vperm.xlu0 %240, %v18
    %v242 = vpop.permute.xlu0 %241
    %v244 = vadd.f32 %v230, %v224
    %v245 = vadd.f32 %v234, %v225
    %v246 = vadd.f32 %v238, %v226
    %v247 = vadd.f32 %v242, %v227
    %v248 = vadd.f32 %v244, %v245
    %v249 = vadd.f32 %v248, %v246
    %v250 = vadd.f32 %v249, %v247
    %v251 = vrot.slane %v250, 4
    %v252 = vadd.f32 %v250, %v251
    %v253 = vrot.slane %v252, 2
    %v254 = vadd.f32 %v252, %v253
    %v255 = vrot.slane %v254, 1
    %v256 = vadd.f32 %v254, %v255
    %v257 = vmul.f32 %v256, %v152
    %v258 = vmul.f32 %v244, %v244
    %v259 = vmul.f32 %v245, %v245
    %v260 = vmul.f32 %v246, %v246
    %v261 = vmul.f32 %v247, %v247
    %v262 = vadd.f32 %v258, %v259
    %v263 = vadd.f32 %v262, %v260
    %v264 = vadd.f32 %v263, %v261
    %v265 = vrot.slane %v264, 4
    %v266 = vadd.f32 %v264, %v265
    %v267 = vrot.slane %v266, 2
    %v268 = vadd.f32 %v266, %v267
    %v269 = vrot.slane %v268, 1
    %v270 = vadd.f32 %v268, %v269
    %v271 = vmul.f32 %v270, %v152
    %v272 = vmul.f32 %v257, %v257
    %v273 = vsub.f32 %v271, %v272
    %v274 = vsub.f32 %v244, %v257
    %v275 = vsub.f32 %v245, %v257
    %v276 = vsub.f32 %v246, %v257
    %v277 = vsub.f32 %v247, %v257
    %v278 = vadd.f32 %v273, 1e-05
    %v279 = vrsqrt.pop %v278
    %v280 = vmul.f32 %v274, %v279
    %v281 = vmul.f32 %v275, %v279
    %v282 = vmul.f32 %v276, %v279
    %v283 = vmul.f32 %v277, %v279
    %284 = vset.pattern.permute.xlu0 2
    %285 = vperm.xlu0 %284, %v15
    %v286 = vpop.permute.xlu0 %285
    %288 = vset.pattern.permute.xlu0 2
    %289 = vperm.xlu0 %288, %v16
    %v290 = vpop.permute.xlu0 %289
    %292 = vset.pattern.permute.xlu0 2
    %293 = vperm.xlu0 %292, %v17
    %v294 = vpop.permute.xlu0 %293
    %296 = vset.pattern.permute.xlu0 2
    %297 = vperm.xlu0 %296, %v18
    %v298 = vpop.permute.xlu0 %297
    %v300 = vmul.f32 %v280, %v286
    %v301 = vmul.f32 %v281, %v290
    %v302 = vmul.f32 %v282, %v294
    %v303 = vmul.f32 %v283, %v298
    %304 = vset.pattern.permute.xlu0 5
    %305 = vperm.xlu0 %304, %v15
    %v306 = vpop.permute.xlu0 %305
    %308 = vset.pattern.permute.xlu0 5
    %309 = vperm.xlu0 %308, %v16
    %v310 = vpop.permute.xlu0 %309
    %312 = vset.pattern.permute.xlu0 5
    %313 = vperm.xlu0 %312, %v17
    %v314 = vpop.permute.xlu0 %313
    %316 = vset.pattern.permute.xlu0 5
    %317 = vperm.xlu0 %316, %v18
    %v318 = vpop.permute.xlu0 %317
    %v320 = vadd.f32 %v300, %v306
    %v321 = vadd.f32 %v301, %v310
    %v322 = vadd.f32 %v302, %v314
    %v323 = vadd.f32 %v303, %v318
    %v324 = vmax.f32 %v320, 0.0
    %v325 = vmax.f32 %v321, 0.0
    %v326 = vmax.f32 %v322, 0.0
    %v327 = vmax.f32 %v323, 0.0
    %v328 = vmul.f32 %v324, 0.5
    %v329 = vmul.f32 %v325, 0.5
    %v330 = vmul.f32 %v326, 0.5
    %v331 = vmul.f32 %v327, 0.5
    %332 = vset.pattern.permute.xlu0 8
    %333 = vperm.xlu0 %332, %v15
    %v334 = vpop.permute.xlu0 %333
    %336 = vset.pattern.permute.xlu0 8
    %337 = vperm.xlu0 %336, %v16
    %v338 = vpop.permute.xlu0 %337
    %340 = vset.pattern.permute.xlu0 8
    %341 = vperm.xlu0 %340, %v17
    %v342 = vpop.permute.xlu0 %341
    %344 = vset.pattern.permute.xlu0 8
    %345 = vperm.xlu0 %344, %v18
    %v346 = vpop.permute.xlu0 %345
    %v348 = vadd.f32 %v334, %v328
    %v349 = vadd.f32 %v338, %v329
    %v350 = vadd.f32 %v342, %v330
    %v351 = vadd.f32 %v346, %v331
    %v352 = vadd.f32 %v348, %v349
    %v353 = vadd.f32 %v352, %v350
    %v354 = vadd.f32 %v353, %v351
    %v355 = vrot.slane %v354, 4
    %v356 = vadd.f32 %v354, %v355
    %v357 = vrot.slane %v356, 2
    %v358 = vadd.f32 %v356, %v357
    %v359 = vrot.slane %v358, 1
    %v360 = vadd.f32 %v358, %v359
    %v361 = vmul.f32 %v360, %v152
    %v362 = vmul.f32 %v348, %v348
    %v363 = vmul.f32 %v349, %v349
    %v364 = vmul.f32 %v350, %v350
    %v365 = vmul.f32 %v351, %v351
    %v366 = vadd.f32 %v362, %v363
    %v367 = vadd.f32 %v366, %v364
    %v368 = vadd.f32 %v367, %v365
    %v369 = vrot.slane %v368, 4
    %v370 = vadd.f32 %v368, %v369
    %v371 = vrot.slane %v370, 2
    %v372 = vadd.f32 %v370, %v371
    %v373 = vrot.slane %v372, 1
    %v374 = vadd.f32 %v372, %v373
    %v375 = vmul.f32 %v374, %v152
    %v376 = vmul.f32 %v361, %v361
    %v377 = vsub.f32 %v375, %v376
    %v378 = vsub.f32 %v348, %v361
    %v379 = vsub.f32 %v349, %v361
    %v380 = vsub.f32 %v350, %v361
    %v381 = vsub.f32 %v351, %v361
    %v382 = vadd.f32 %v377, 1e-05
    %v383 = vrsqrt.pop %v382
    %v384 = vmul.f32 %v378, %v383
    %v385 = vmul.f32 %v379, %v383
    %v386 = vmul.f32 %v380, %v383
    %v387 = vmul.f32 %v381, %v383
    %388 = vset.pattern.permute.xlu0 3
    %389 = vperm.xlu0 %388, %v15
    %v390 = vpop.permute.xlu0 %389
    %392 = vset.pattern.permute.xlu0 3
    %393 = vperm.xlu0 %392, %v16
    %v394 = vpop.permute.xlu0 %393
    %396 = vset.pattern.permute.xlu0 3
    %397 = vperm.xlu0 %396, %v17
    %v398 = vpop.permute.xlu0 %397
    %400 = vset.pattern.permute.xlu0 3
    %401 = vperm.xlu0 %400, %v18
    %v402 = vpop.permute.xlu0 %401
    %v404 = vmul.f32 %v384, %v390
    %v405 = vmul.f32 %v385, %v394
    %v406 = vmul.f32 %v386, %v398
    %v407 = vmul.f32 %v387, %v402
    %408 = vset.pattern.permute.xlu0 6
    %409 = vperm.xlu0 %408, %v15
    %v410 = vpop.permute.xlu0 %409
    %412 = vset.pattern.permute.xlu0 6
    %413 = vperm.xlu0 %412, %v16
    %v414 = vpop.permute.xlu0 %413
    %416 = vset.pattern.permute.xlu0 6
    %417 = vperm.xlu0 %416, %v17
    %v418 = vpop.permute.xlu0 %417
    %420 = vset.pattern.permute.xlu0 6
    %421 = vperm.xlu0 %420, %v18
    %v422 = vpop.permute.xlu0 %421
    %v424 = vadd.f32 %v404, %v410
    %v425 = vadd.f32 %v405, %v414
    %v426 = vadd.f32 %v406, %v418
    %v427 = vadd.f32 %v407, %v422
    %v428 = vmax.f32 %v424, 0.0
    %v429 = vmax.f32 %v425, 0.0
    %v430 = vmax.f32 %v426, 0.0
    %v431 = vmax.f32 %v427, 0.0
    %432 = vst [vmem:[#allocation2] sm:$0xff] %v428
    %433 = vst [vmem:[#allocation2 + $0x8] sm:$0xff] %v429
    %434 = vst [vmem:[#allocation2 + $0x10] sm:$0xff] %v430
    %435 = vst [vmem:[#allocation2 + $0x18] sm:$0xff] %v431
    // Predicated region
    $region14: #{_seedtrans_forward.1} parent=1 // pred_check
      _
    $region15: #{_seedtrans_forward.1} parent=1 // pred_check_branch
      %437 = sbr.rel (0) target = $region17
    $region16: #{_seedtrans_forward.1} parent=1 // pred_region
      %s439 = ssub.s32 512, 512
      %440 = vsyncadd [#allocation3], %s439
      %s441 = sshll.u32 [#allocation2], 4
      %s442 = int_to_ptr.vmem [resolvable:$true] %s441
      %447 = dma.vmem_to_hbm [thread:$0]  %s442, 512, %s3, [#allocation3], 128, 128, 8
    $region17: #{_seedtrans_forward.1} parent=1 // pred_fallthru
      _
    // Predicated region
    $region18: #{_seedtrans_forward.1} parent=1 // pred_check
      _
    $region19: #{_seedtrans_forward.1} parent=1 // pred_check_branch
      %449 = sbr.rel (0) target = $region21
    $region20: #{_seedtrans_forward.1} parent=1 // pred_region
      %450 = dma.done [#allocation3], 512
    $region21: #{_seedtrans_forward.1} parent=1 // pred_fallthru
      _
    %451 = vsyncpa [#allocation3], 1

</llo_original>
